<compile_context>
chip_gen: v7x
topology: tpu7x:2x2x1
jax: 0.10.0
libtpu: 0.0.40
codegen_flags: <defaults>
</compile_context>

<pallas_src>
import jax
import jax.numpy as jnp
from jax.experimental import pallas as pl
from jax.experimental.pallas import tpu as pltpu

LANE = 128                 # lane-dense last dim (one full vreg width)
MAX_ROWS_PER_TILE = 2048   # 2048*128*4B = 1 MiB f32 block (~4 MiB double-buffered)
MIN_ROWS_PER_TILE = 8
TARGET_TILES = 8           # keep >= ~8 grid steps at large N (v7x has 2 TCs)


def mlp_kernel(p_ref, x_ref, o_ref):
    # p_ref (SMEM, f32[8]): [w1_0, w1_1, b1_0, b1_1, w2_0, w2_1, b2, pad]
    w10 = p_ref[0]
    w11 = p_ref[1]
    b10 = p_ref[2]
    b11 = p_ref[3]
    w20 = p_ref[4]
    w21 = p_ref[5]
    b2 = p_ref[6]

    x = x_ref[...].astype(jnp.float32)      # in-kernel upcast (VPU, free)
    h0 = jnp.tanh(x * w10 + b10)            # hidden unit 0 (VPU + EUP tanh)
    h1 = jnp.tanh(x * w11 + b11)            # hidden unit 1
    y = h0 * w20 + h1 * w21 + b2
    o_ref[...] = y.astype(o_ref.dtype)      # in-kernel downcast to output dtype


def _round_up(a, b):
    return pl.cdiv(a, b) * b


def network_arch_forward(x, w1, b1, w2, b2):
    """fc2(tanh(fc1(x))) for fc1: 1->2, fc2: 2->1.

    x : (N, 1)                 input (any float dtype)
    w1: (1, 2) fc1.weight.T    b1: (1, 2) or (2,) fc1.bias
    w2: (2, 1) fc2.weight.T    b2: (1, 1) or (1,) fc2.bias
    Returns (N, 1) in x.dtype.
    """
    n = x.shape[0]
    dtype = x.dtype

    # Pack the 7 parameter scalars into one SMEM-resident f32 array.
    params = jnp.concatenate([
        w1.reshape(-1).astype(jnp.float32),   # w1_0, w1_1
        b1.reshape(-1).astype(jnp.float32),   # b1_0, b1_1
        w2.reshape(-1).astype(jnp.float32),   # w2_0, w2_1
        b2.reshape(-1).astype(jnp.float32),   # b2
        jnp.zeros((1,), jnp.float32),         # pad to 8
    ])

    # Lane-dense slab in the input's native dtype (no wrapper cast pass).
    x_flat = x.reshape(-1)                    # contiguous reshape: free
    if n % LANE != 0:
        # Pad only when needed, up to a multiple of 8*LANE so the slab's row
        # count is a multiple of 8 (keeps all blocks aligned).
        padded_n = _round_up(n, 8 * LANE)
        x_flat = jnp.pad(x_flat, (0, padded_n - n))
    else:
        padded_n = n

    rows = padded_n // LANE
    x_slab = x_flat.reshape(rows, LANE)

    # Block sizing: aim for ~TARGET_TILES grid steps, 8 <= rows_per_tile <= 2048
    # (multiple of 8). For tiny inputs a single full-extent block is used.
    if rows <= MIN_ROWS_PER_TILE:
        rows_per_tile = rows
    else:
        rpt = _round_up(pl.cdiv(rows, TARGET_TILES), 8)
        rows_per_tile = max(MIN_ROWS_PER_TILE, min(MAX_ROWS_PER_TILE, rpt))
        rows_per_tile = min(rows_per_tile, rows)
    num_tiles = pl.cdiv(rows, rows_per_tile)

    out_slab = pl.pallas_call(
        mlp_kernel,
        out_shape=jax.ShapeDtypeStruct((rows, LANE), dtype),
        grid=(num_tiles,),
        in_specs=[
            pl.BlockSpec(memory_space=pltpu.MemorySpace.SMEM),        # params
            pl.BlockSpec((rows_per_tile, LANE), lambda i: (i, 0)),    # x tile
        ],
        out_specs=pl.BlockSpec((rows_per_tile, LANE), lambda i: (i, 0)),
        compiler_params=pltpu.CompilerParams(
            dimension_semantics=("parallel",)),
    )(params, x_slab)

    # Undo layout change; slice only if padding was actually added.
    out_flat = out_slab.reshape(-1)
    if padded_n != n:
        out_flat = out_flat[:n]
    return out_flat.reshape(n, 1)


def reference_forward(x, w1, b1, w2, b2):
    h = jnp.tanh(x @ w1 + b1)
    return h @ w2 + b2


if __name__ == "__main__":
    key = jax.random.PRNGKey(0)
    k_x, k_w1, k_b1, k_w2, k_b2 = jax.random.split(key, 5)

    # N=2000 -> pads to 2048 -> (16, 128) slab, two (8, 128) blocks (exercises
    # padding + a multi-step grid while staying small).
    N = 2000
    x = jax.random.normal(k_x, (N, 1), dtype=jnp.float32)

    # Same shapes as nn.Linear(1, 2) / nn.Linear(2, 1), stored transposed
    # (x @ W convention).
    w1 = jax.random.normal(k_w1, (1, 2), dtype=jnp.float32) * 0.5   # fc1.weight.T
    b1 = jax.random.normal(k_b1, (1, 2), dtype=jnp.float32) * 0.1   # fc1.bias
    w2 = jax.random.normal(k_w2, (2, 1), dtype=jnp.float32) * 0.5   # fc2.weight.T
    b2 = jax.random.normal(k_b2, (1, 1), dtype=jnp.float32) * 0.1   # fc2.bias

    out = network_arch_forward(x, w1, b1, w2, b2)
    out = jax.block_until_ready(out)

    ref = reference_forward(x, w1, b1, w2, b2)
    assert out.shape == (N, 1)
    assert jnp.allclose(out, ref, atol=1e-5, rtol=1e-5), (out, ref)

    print("KERNEL_OK")
</pallas_src>

<mosaic_0001>
module attributes {stable_mosaic.version = 11 : i64} {
  func.func @mlp_kernel(%arg0: i32, %arg1: memref<8xf32, #tpu.memory_space<smem>>, %arg2: memref<8x128xf32, #tpu.memory_space<vmem>>, %arg3: memref<8x128xf32, #tpu.memory_space<vmem>>) attributes {dimension_semantics = [#tpu.dimension_semantics<parallel>], iteration_bounds = array<i64: 2>, scalar_prefetch = 0 : i64, scratch_operands = 0 : i64, tpu.core_type = #tpu.core_type<tc>, window_params = [{transform_indices = @transform_0, window_bounds = array<i64: 8>}, {transform_indices = @transform_1, window_bounds = array<i64: 8, 128>}, {transform_indices = @transform_2, window_bounds = array<i64: 8, 128>}]} {
    %c0 = arith.constant 0 : index
    %0 = memref.load %arg1[%c0] : memref<8xf32, #tpu.memory_space<smem>>
    %c1 = arith.constant 1 : index
    %1 = memref.load %arg1[%c1] : memref<8xf32, #tpu.memory_space<smem>>
    %c2 = arith.constant 2 : index
    %2 = memref.load %arg1[%c2] : memref<8xf32, #tpu.memory_space<smem>>
    %c3 = arith.constant 3 : index
    %3 = memref.load %arg1[%c3] : memref<8xf32, #tpu.memory_space<smem>>
    %c4 = arith.constant 4 : index
    %4 = memref.load %arg1[%c4] : memref<8xf32, #tpu.memory_space<smem>>
    %c5 = arith.constant 5 : index
    %5 = memref.load %arg1[%c5] : memref<8xf32, #tpu.memory_space<smem>>
    %c6 = arith.constant 6 : index
    %6 = memref.load %arg1[%c6] : memref<8xf32, #tpu.memory_space<smem>>
    %c0_0 = arith.constant 0 : index
    %c0_1 = arith.constant 0 : index
    %7 = vector.load %arg2[%c0_0, %c0_1] : memref<8x128xf32, #tpu.memory_space<vmem>>, vector<8x128xf32>
    %8 = vector.broadcast %0 : f32 to vector<8x128xf32>
    %9 = arith.mulf %7, %8 : vector<8x128xf32>
    %10 = vector.broadcast %2 : f32 to vector<8x128xf32>
    %11 = arith.addf %9, %10 : vector<8x128xf32>
    %12 = math.tanh %11 : vector<8x128xf32>
    %13 = vector.broadcast %1 : f32 to vector<8x128xf32>
    %14 = arith.mulf %7, %13 : vector<8x128xf32>
    %15 = vector.broadcast %3 : f32 to vector<8x128xf32>
    %16 = arith.addf %14, %15 : vector<8x128xf32>
    %17 = math.tanh %16 : vector<8x128xf32>
    %18 = vector.broadcast %4 : f32 to vector<8x128xf32>
    %19 = arith.mulf %12, %18 : vector<8x128xf32>
    %20 = vector.broadcast %5 : f32 to vector<8x128xf32>
    %21 = arith.mulf %17, %20 : vector<8x128xf32>
    %22 = arith.addf %19, %21 : vector<8x128xf32>
    %23 = vector.broadcast %6 : f32 to vector<8x128xf32>
    %24 = arith.addf %22, %23 : vector<8x128xf32>
    %c0_2 = arith.constant 0 : index
    %c0_3 = arith.constant 0 : index
    %25 = vector.load %arg3[%c0_2, %c0_3] : memref<8x128xf32, #tpu.memory_space<vmem>>, vector<8x128xf32>
    tpu.vector_store %arg3[%c0_2, %c0_3], %24 {strides = array<i32>} : memref<8x128xf32, #tpu.memory_space<vmem>>, vector<8x128xf32>,
    return
  }
  func.func @transform_0(%arg0: i32) -> i32 {
    %c0_i32 = arith.constant 0 : i32
    %c0_i32_0 = arith.constant 0 : i32
    return %c0_i32 : i32
  }
  func.func @transform_1(%arg0: i32) -> (i32, i32) {
    %c0_i32 = arith.constant 0 : i32
    %c0_i32_0 = arith.constant 0 : i32
    return %arg0, %c0_i32 : i32, i32
  }
  func.func @transform_2(%arg0: i32) -> (i32, i32) {
    %c0_i32 = arith.constant 0 : i32
    %c0_i32_0 = arith.constant 0 : i32
    return %arg0, %c0_i32 : i32, i32
  }
}

</mosaic_0001>

<llo_original>
// kernel: tpu_custom_call.1
$region0: #{tpu_custom_call.1}
  #allocation0 [shape = 'u32[]', space=smem, size = 0x4, offset = 0x4, fixed_abs, tag = 'smem constant byte address 0x4 - core index']
  #allocation1 [shape = 'u32[144,128]{1,0:T(1,128)}', space=vmem, size = 0x12000, scoped, tag = 'internal scratch']
  %s0 = inlined_call_operand.hbm [shape: f32[8], index: 0, kind: input, shape index: {}]
  %s1 = inlined_call_operand.hbm [shape: f32[16,128], index: 1, kind: input, shape index: {}]
  %s2 = inlined_call_operand.hbm [shape: f32[16,128], index: 2, kind: output, shape index: {}]
  %s3 = sld [smem:[#allocation0]]
  $region49: #{tpu_custom_call.1} parent=0
    _
  %s5 = ssub.s32 1, %s3
  %s6 = scalar_select 0, %s5, %s3
  $region1: #{tpu_custom_call.1} parent=0
    #allocation2 [shape = 'u8[512]{0}', space=smem, size = 0x200, scoped, tag = 'input window, operand 0, single buffered']
    #allocation3 [shape = 's32[2]{0}', space=sflag, size = 0x8, scoped, tag = 'scoped memory for tpu_custom_call.1']
    #allocation4 [shape = 's32[2]{0}', space=sflag, size = 0x8, scoped, tag = 'scoped memory for tpu_custom_call.1']
    #allocation5 [shape = 's32[2]{0}', space=sflag, size = 0x8, scoped, tag = 'scoped memory for tpu_custom_call.1']
    #allocation6 [shape = 'u8[8192]{0}', space=vmem, size = 0x2000, scoped, tag = 'input window, operand 1']
    #allocation7 [shape = 'u8[8192]{0}', space=vmem, size = 0x2000, scoped, tag = 'output window, operand 0']
    %7 = vsyncpa [#allocation5], 0
    %8 = vsyncpa [#allocation3], 0
    %s9 = scalar_lea.sflag [#allocation3], 1
    %10 = vsyncpa %s9, 0
    %11 = vsyncpa [#allocation4], 0
    %s12 = scalar_lea.sflag [#allocation4], 1
    %13 = vsyncpa %s12, 0
    loop: start=0, step=1, limit=4
    $region2: #{tpu_custom_call.1} parent=1 // loop_pre_header
      _
    $region3: #{tpu_custom_call.1} parent=1 // loop_header
      %s15 = sphi 0, %s19
      %p16 = scmp.ge.s32.totalorder %s15, 4
      %s23 = sphi 0, %s23
      %s25 = sphi 0, %s23
      %s26 = sphi 0, %s25
      %s40 = sphi 0, %s26
      %s46 = sphi 0, %s48
      %s49 = sphi 0, %s46
      %s50 = sphi 0, %s49
      %s66 = sphi 0, %s50
      %s72 = sphi 0, %s74
      %s75 = sphi 0, %s72
      %s76 = sphi 0, %s75
      %s92 = sphi 0, %s76
    $region4: #{tpu_custom_call.1} parent=1 // loop_header_branch
      %18 = sbr.rel (%p16) target = $region8
    $region5: #{tpu_custom_call.1} parent=1 // loop_body
      %s20 = ssub.s32 %s15, 1
      %s21 = ssub.s32 %s15, 2
      %s22 = sadd.s32 %s15, 1
      %s24 = sadd.s32 %s23, 1
      %p27 = scmp.eq.s32.totalorder %s15, 1
      %p28 = scmp.ne.s32.totalorder %s23, %s25
      %p29 = scmp.eq.s32.totalorder %s15, 0
      %p30 = por %p28, %p29
      %p31 = scmp.ne.s32.totalorder %s23, %s25
      %p32 = scmp.eq.s32.totalorder %s20, 1
      %p33 = por %p31, %p32
      %p34 = scmp.ne.s32.totalorder %s25, %s26
      %p35 = scmp.eq.s32.totalorder %s20, 0
      %p36 = por %p34, %p35
      %p37 = scmp.ne.s32.totalorder %s25, %s26
      %p38 = scmp.eq.s32.totalorder %s21, 1
      %p39 = por %p37, %p38
      %p41 = scmp.ne.s32.totalorder %s26, %s40
      %p42 = scmp.eq.s32.totalorder %s21, 0
      %p43 = por %p41, %p42
      %s44 = ssub.s32 %s15, %s22
      %p45 = scmp.eq.s32.totalorder %s44, 0
      %s47 = sadd.s32 %s46, 1
      %s48 = scalar_select %p45, %s46, %s47
      %p51 = pneg %p45
      %p52 = scmp.eq.s32.totalorder %s15, 1
      %p53 = por %p51, %p52
      %p54 = scmp.ne.s32.totalorder %s46, %s49
      %p55 = scmp.eq.s32.totalorder %s15, 0
      %p56 = por %p54, %p55
      %p57 = scmp.ne.s32.totalorder %s46, %s49
      %p58 = scmp.eq.s32.totalorder %s20, 1
      %p59 = por %p57, %p58
      %p60 = scmp.ne.s32.totalorder %s49, %s50
      %p61 = scmp.eq.s32.totalorder %s20, 0
      %p62 = por %p60, %p61
      %p63 = scmp.ne.s32.totalorder %s49, %s50
      %p64 = scmp.eq.s32.totalorder %s21, 1
      %p65 = por %p63, %p64
      %p67 = scmp.ne.s32.totalorder %s50, %s66
      %p68 = scmp.eq.s32.totalorder %s21, 0
      %p69 = por %p67, %p68
      %s70 = ssub.s32 %s15, %s22
      %p71 = scmp.eq.s32.totalorder %s70, 0
      %s73 = sadd.s32 %s72, 1
      %s74 = scalar_select %p71, %s72, %s73
      %p77 = pneg %p71
      %p78 = scmp.eq.s32.totalorder %s15, 1
      %p79 = por %p77, %p78
      %p80 = scmp.ne.s32.totalorder %s72, %s75
      %p81 = scmp.eq.s32.totalorder %s15, 0
      %p82 = por %p80, %p81
      %p83 = scmp.ne.s32.totalorder %s72, %s75
      %p84 = scmp.eq.s32.totalorder %s20, 1
      %p85 = por %p83, %p84
      %p86 = scmp.ne.s32.totalorder %s75, %s76
      %p87 = scmp.eq.s32.totalorder %s20, 0
      %p88 = por %p86, %p87
      %p89 = scmp.ne.s32.totalorder %s75, %s76
      %p90 = scmp.eq.s32.totalorder %s21, 1
      %p91 = por %p89, %p90
      %p93 = scmp.ne.s32.totalorder %s76, %s92
      %p94 = scmp.eq.s32.totalorder %s21, 0
      %p95 = por %p93, %p94
      %p96 = scmp.le.s32.totalorder 1, %s15
      %p97 = scmp.lt.s32.totalorder %s15, 3
      %p98 = pnand %p96, %p97
      %p99 = pneg %p98
      // Predicated region
      $region9: #{tpu_custom_call.1} parent=5 // pred_check
        _
      $region10: #{tpu_custom_call.1} parent=5 // pred_check_branch
        %101 = sbr.rel (%p98) target = $region12
      $region11: #{tpu_custom_call.1} parent=5 // pred_region
        %s102 = ssub.s32 %s15, 1
        // Predicated region
        $region13: #{tpu_custom_call.1} parent=11 // pred_check
          %p103 = pneg %p36
        $region14: #{tpu_custom_call.1} parent=11 // pred_check_branch
          %105 = sbr.rel (%p103) target = $region16
        $region15: #{tpu_custom_call.1} parent=11 // pred_region
          %s107 = ssub.s32 16, 16
          %108 = vsyncadd [#allocation5], %s107
          %111 = dma.hbm_to_smem %s0, 16, [#allocation2], [#allocation5]
        $region16: #{tpu_custom_call.1} parent=11 // pred_fallthru
          _
      $region12: #{tpu_custom_call.1} parent=5 // pred_fallthru
        _
      %p112 = scmp.lt.s32.totalorder %s15, 2
      // Predicated region
      $region17: #{tpu_custom_call.1} parent=5 // pred_check
        %p113 = pneg %p112
      $region18: #{tpu_custom_call.1} parent=5 // pred_check_branch
        %115 = sbr.rel (%p113) target = $region20
      $region19: #{tpu_custom_call.1} parent=5 // pred_region
        // Predicated region
        $region21: #{tpu_custom_call.1} parent=19 // pred_check
          %p116 = pneg %p56
        $region22: #{tpu_custom_call.1} parent=19 // pred_check_branch
          %118 = sbr.rel (%p116) target = $region24
        $region23: #{tpu_custom_call.1} parent=19 // pred_region
          %s119 = sand.u32 %s46, 1
          %s120 = scalar_lea.sflag [#allocation3], %s119
          %s121 = sand.u32 %s46, 1
          %s122 = smul.addr %s121, 8
          %s123 = scalar_lea.vmem [#allocation6], %s122
          %s125 = ssub.s32 128, 128
          %126 = vsyncadd %s120, %s125
          %s127 = smul.addr %s15, 128
          %s128 = scalar_lea.hbm %s1, %s127
          %s130 = sshll.u32 %s123, 4
          %s131 = int_to_ptr.vmem [resolvable:$true] %s130
          %133 = dma.hbm_to_vmem [thread:$0]  %s128, 128, %s131, %s120
        $region24: #{tpu_custom_call.1} parent=19 // pred_fallthru
          _
      $region20: #{tpu_custom_call.1} parent=5 // pred_fallthru
        _
      %p134 = scmp.le.s32.totalorder 1, %s15
      %p135 = scmp.lt.s32.totalorder %s15, 3
      %p136 = pnand %p134, %p135
      %p137 = pneg %p136
      // Predicated region
      $region25: #{tpu_custom_call.1} parent=5 // pred_check
        _
      $region26: #{tpu_custom_call.1} parent=5 // pred_check_branch
        %139 = sbr.rel (%p136) target = $region28
      $region27: #{tpu_custom_call.1} parent=5 // pred_region
        %s140 = ssub.s32 %s15, 1
        // Predicated region
        $region29: #{tpu_custom_call.1} parent=27 // pred_check
          %p141 = pneg %p36
        $region30: #{tpu_custom_call.1} parent=27 // pred_check_branch
          %143 = sbr.rel (%p141) target = $region32
        $region31: #{tpu_custom_call.1} parent=27 // pred_region
          %144 = dma.done [#allocation5], 16
        $region32: #{tpu_custom_call.1} parent=27 // pred_fallthru
          _
        %s145 = sand.u32 %s49, 1
        %s146 = scalar_lea.sflag [#allocation3], %s145
        %s147 = sand.u32 %s49, 1
        %s148 = smul.addr %s147, 8
        %s149 = scalar_lea.vmem [#allocation6], %s148
        // Predicated region
        $region33: #{tpu_custom_call.1} parent=27 // pred_check
          %p150 = pneg %p62
        $region34: #{tpu_custom_call.1} parent=27 // pred_check_branch
          %152 = sbr.rel (%p150) target = $region36
        $region35: #{tpu_custom_call.1} parent=27 // pred_region
          %153 = dma.done %s146, 128
        $region36: #{tpu_custom_call.1} parent=27 // pred_fallthru
          _
        %154 = sfence
        %p155 = pneg %p36
        %p156 = pneg %p33
        %s157 = sand.u32 %s49, 1
        %s158 = scalar_lea.sflag [#allocation3], %s157
        %s159 = sand.u32 %s49, 1
        %s160 = smul.addr %s159, 8
        %s161 = scalar_lea.vmem [#allocation6], %s160
        %p162 = pneg %p62
        %p163 = pneg %p59
        %p164 = pneg %p88
        %p165 = pneg %p85
        %s166 = sand.u32 %s75, 1
        %s167 = scalar_lea.sflag [#allocation4], %s166
        %s168 = sand.u32 %s75, 1
        %s169 = smul.addr %s168, 8
        %s170 = scalar_lea.vmem [#allocation7], %s169
        %s171 = sld [smem:[#allocation2]]
        %s172 = sld [smem:[#allocation2 + $0x1]]
        %s173 = sld [smem:[#allocation2 + $0x2]]
        %s174 = sld [smem:[#allocation2 + $0x3]]
        %s175 = sld [smem:[#allocation2 + $0x4]]
        %s176 = sld [smem:[#allocation2 + $0x5]]
        %s177 = sld [smem:[#allocation2 + $0x6]]
        %v178 = vld [vmem:[%s149] sm:$0xff]
        %v179 = vstv %s171
        %v180 = vmul.f32 %v178, %v179
        %v181 = vstv %s173
        %v182 = vadd.f32 %v180, %v181
        %v183 = vtanh.pop %v182
        %v184 = vstv %s172
        %v185 = vmul.f32 %v178, %v184
        %v186 = vstv %s174
        %v187 = vadd.f32 %v185, %v186
        %v188 = vtanh.pop %v187
        %v189 = vstv %s175
        %v190 = vmul.f32 %v183, %v189
        %v191 = vstv %s176
        %v192 = vmul.f32 %v188, %v191
        %v193 = vadd.f32 %v190, %v192
        %v194 = vstv %s177
        %v195 = vadd.f32 %v193, %v194
        %196 = vst [vmem:[%s170] sm:$0xff] %v195
        %s197 = sand.u32 %s75, 1
        %s198 = scalar_lea.sflag [#allocation4], %s197
        %s199 = sand.u32 %s75, 1
        %s200 = smul.addr %s199, 8
        %s201 = scalar_lea.vmem [#allocation7], %s200
        // Predicated region
        $region37: #{tpu_custom_call.1} parent=27 // pred_check
          %p202 = pneg %p85
        $region38: #{tpu_custom_call.1} parent=27 // pred_check_branch
          %204 = sbr.rel (%p202) target = $region40
        $region39: #{tpu_custom_call.1} parent=27 // pred_region
          %s206 = ssub.s32 128, 128
          %207 = vsyncadd %s198, %s206
          %s208 = smul.addr %s20, 128
          %s209 = scalar_lea.hbm %s2, %s208
          %s211 = sshll.u32 %s201, 4
          %s212 = int_to_ptr.vmem [resolvable:$true] %s211
          %214 = dma.vmem_to_hbm [thread:$0]  %s212, 128, %s209, %s198
        $region40: #{tpu_custom_call.1} parent=27 // pred_fallthru
          _
      $region28: #{tpu_custom_call.1} parent=5 // pred_fallthru
        _
      %p215 = scmp.le.s32.totalorder 2, %s15
      // Predicated region
      $region41: #{tpu_custom_call.1} parent=5 // pred_check
        %p216 = pneg %p215
      $region42: #{tpu_custom_call.1} parent=5 // pred_check_branch
        %218 = sbr.rel (%p216) target = $region44
      $region43: #{tpu_custom_call.1} parent=5 // pred_region
        %s219 = ssub.s32 %s15, 2
        // Predicated region
        $region45: #{tpu_custom_call.1} parent=43 // pred_check
          %p220 = pneg %p91
        $region46: #{tpu_custom_call.1} parent=43 // pred_check_branch
          %222 = sbr.rel (%p220) target = $region48
        $region47: #{tpu_custom_call.1} parent=43 // pred_region
          %s223 = sand.u32 %s76, 1
          %s224 = scalar_lea.sflag [#allocation4], %s223
          %s225 = sand.u32 %s76, 1
          %s226 = smul.addr %s225, 8
          %s227 = scalar_lea.vmem [#allocation7], %s226
          %228 = dma.done %s224, 128
        $region48: #{tpu_custom_call.1} parent=43 // pred_fallthru
          _
      $region44: #{tpu_custom_call.1} parent=5 // pred_fallthru
        _
    $region6: #{tpu_custom_call.1} parent=1 // loop_footer
      %s19 = sadd.s32 1, %s15
    $region7: #{tpu_custom_call.1} parent=1 // loop_footer_branch
      %14 = sbr.rel target = $region3
    $region8: #{tpu_custom_call.1} parent=1 // loop_exit
      _
    %229 = vsyncpa [#allocation3], 1
    %s230 = scalar_lea.sflag [#allocation3], 1
    %231 = vsyncpa %s230, 1
    %232 = vsyncpa [#allocation4], 1
    %s233 = scalar_lea.sflag [#allocation4], 1
    %234 = vsyncpa %s233, 1
    %235 = vsyncpa [#allocation5], 1
    %s236 = scalar_lea.sflag [#allocation5], 1
    %237 = vsyncpa %s236, 1

</llo_original>
